<compile_context>
chip_gen: v7x
topology: tpu7x:2x2x1
jax: 0.10.0
libtpu: 0.0.40
codegen_flags: <defaults>
</compile_context>

<pallas_src>
import jax
import jax.numpy as jnp
from jax.experimental import pallas as pl
from jax.experimental.pallas import tpu as pltpu


def dcnn_kernel(p_ref, xs_ref, wd_ref, b_ref, out_ref):
    # p_ref  : (block_n, Hk*Nk) f32   node-row tile of P; columns = hop-blocked source nodes
    # xs_ref : (Hk, Nk, Fk)     bf16  per-hop Wc-scaled features (or folded block-diag form)
    # wd_ref : (Hk*Fk, Cp)      bf16  dense weight (hop-major rows, class-padded columns)
    # b_ref  : (1, Cp)          f32   dense bias (class-padded)
    # out_ref: (block_n, Cp)    f32
    Hk, Nk, Fk = xs_ref.shape

    # Per-hop diffusion matmul (MXU, bf16 in / f32 acc) + tanh (EUP), streamed
    # straight into the dense matmul:  embed @ Wd == sum_h tanh(P_h @ Xs_h) @ Wd[h*F:(h+1)*F].
    # Hk is a tiny static trip count -> fully unrolled; no concat, no live slab list.
    acc = jnp.zeros(out_ref.shape, jnp.float32)
    for h in range(Hk):
        p_h = p_ref[:, h * Nk:(h + 1) * Nk].astype(jnp.bfloat16)
        z_h = jnp.dot(p_h, xs_ref[h], preferred_element_type=jnp.float32)
        e_h = jnp.tanh(z_h).astype(jnp.bfloat16)
        acc = acc + jnp.dot(e_h, wd_ref[h * Fk:(h + 1) * Fk, :],
                            preferred_element_type=jnp.float32)

    # Bias + final tanh; lane-dense store (Cp is a multiple of 128).
    out_ref[...] = jnp.tanh(acc + b_ref[...]).astype(out_ref.dtype)


def node_class_dcnn(P, X, Wc, Wd, b, *, block_n=None, fold_hops=None):
    """P: (N, H+1, N), X: (N, F), Wc: (H+1, F), Wd: ((H+1)*F, C), b: (1, C)."""
    N, H1, N2 = P.shape
    assert N2 == N, "P must be (num_nodes, n_hop+1, num_nodes)"
    F = X.shape[1]
    C = Wd.shape[1]

    # Fold Wc into X:  (P_h @ X) * Wc[h] == P_h @ (X * Wc[h]).
    Xs = X[None, :, :] * Wc[:, None, :]                       # (H1, N, F) f32

    # Small-F fast path: fold hops into lanes with a block-diagonal RHS so the
    # diffusion step is a single lane-dense matmul (no per-hop loop/slicing).
    if fold_hops is None:
        fold_hops = (H1 * N) * (H1 * F) * 2 <= (4 << 20)       # folded RHS <= 4 MiB
    if fold_hops:
        Xk = jnp.zeros((H1 * N, H1 * F), jnp.float32)
        for h in range(H1):
            Xk = Xk.at[h * N:(h + 1) * N, h * F:(h + 1) * F].set(Xs[h])
        Xk = Xk[None].astype(jnp.bfloat16)                     # (1, H1*N, H1*F)
    else:
        Xk = Xs.astype(jnp.bfloat16)                           # (H1, N, F)

    # P: zero-cost row-major view; NO wrapper transpose / cast / pad copy of the
    # dominant HBM operand (bf16 cast happens on-chip, per tile).
    P2 = P.reshape(N, H1 * N)

    # Node-row tiling: MXU-friendly block; keep >= 2 grid steps when possible
    # so the 'parallel' axis can shard across v7x's two TensorCores.
    if block_n is None:
        block_n = min(256, pl.cdiv(N, 8) * 8)
        if N > 8 and pl.cdiv(N, block_n) < 2:
            block_n = max(8, pl.cdiv(pl.cdiv(N, 2), 8) * 8)
    n_pad = pl.cdiv(N, block_n) * block_n
    if n_pad != N:
        P2 = jnp.pad(P2, ((0, n_pad - N), (0, 0)))
    grid = (n_pad // block_n,)

    # Lane-dense output: pad the class axis to a multiple of 128.  Dense weight
    # in bf16 (halves resident VMEM + HBM bytes, 3-4x MXU rate); bias stays f32.
    Cp = pl.cdiv(C, 128) * 128
    Wd_p = jnp.zeros((H1 * F, Cp), jnp.bfloat16).at[:, :C].set(Wd.astype(jnp.bfloat16))
    b_p = jnp.zeros((1, Cp), jnp.float32).at[:, :C].set(
        b.reshape(1, C).astype(jnp.float32))

    # VMEM: size the limit from the actual footprint (double-buffered P/out
    # tiles + resident Xk/Wd/b) instead of a flat one-size-fits-all cap.
    vmem_need = (2 * block_n * (H1 * N) * 4 + 2 * block_n * Cp * 4
                 + Xk.size * 2 + Wd_p.size * 2 + Cp * 4)
    vmem_limit = int(min(max(2 * vmem_need, 32 << 20), 96 << 20))

    cost = pl.CostEstimate(
        flops=(2 * n_pad * Xk.shape[0] * Xk.shape[1] * Xk.shape[2]
               + 2 * n_pad * (H1 * F) * Cp),
        transcendentals=n_pad * H1 * F + n_pad * Cp,
        bytes_accessed=(P2.size * 4 + Xk.size * 2 + Wd_p.size * 2
                        + b_p.size * 4 + n_pad * Cp * 4),
    )

    out = pl.pallas_call(
        dcnn_kernel,
        out_shape=jax.ShapeDtypeStruct((n_pad, Cp), jnp.float32),
        grid_spec=pltpu.PrefetchScalarGridSpec(
            num_scalar_prefetch=0,
            grid=grid,
            in_specs=[
                # P: tile over node-rows; hop-blocked source-node axis kept whole.
                pl.BlockSpec((block_n, H1 * N), lambda i: (i, 0)),
                # Constant-index operands stay resident across the grid.
                pl.BlockSpec(Xk.shape, lambda i: (0, 0, 0)),    # Wc-scaled X
                pl.BlockSpec((H1 * F, Cp), lambda i: (0, 0)),   # dense weight
                pl.BlockSpec((1, Cp), lambda i: (0, 0)),        # dense bias
            ],
            out_specs=pl.BlockSpec((block_n, Cp), lambda i: (i, 0)),
        ),
        compiler_params=pltpu.CompilerParams(
            dimension_semantics=("parallel",),   # shards node blocks across TCs (v7x)
            vmem_limit_bytes=vmem_limit,
        ),
        cost_estimate=cost,
    )(P2, Xk, Wd_p, b_p)

    return out[:N, :C]


def reference(P, X, Wc, Wd, b):
    Z = jnp.einsum("nhm,mf->nhf", P, X)               # torch: P @ X (batched)
    embed = jnp.tanh(Z * Wc[None, :, :])
    embed2 = embed.reshape(embed.shape[0], -1)        # (hop, feat) flattening
    return jnp.tanh(embed2 @ Wd + b)


if __name__ == "__main__":
    # Small shapes consistent with the module: num_nodes=16, feat=32, n_hop=3, 8 classes.
    N, F, H, C = 16, 32, 3, 8
    H1 = H + 1

    key = jax.random.PRNGKey(0)
    k_p, k_x, k_wc, k_wd, k_b = jax.random.split(key, 5)

    # Synthetic row-stochastic-ish hop-power tensor and features.
    P = jax.nn.softmax(jax.random.normal(k_p, (N, H1, N), jnp.float32), axis=-1)
    X = jax.random.normal(k_x, (N, F), jnp.float32)

    # Deterministic parameter init (synthetic; matches the __init__ shapes).
    Wc = 0.1 * jax.random.normal(k_wc, (H1, F), jnp.float32)
    Wd = 0.1 * jax.random.normal(k_wd, (H1 * F, C), jnp.float32)  # Linear weight, transposed
    b = 0.01 * jax.random.normal(k_b, (1, C), jnp.float32)

    ref = jax.block_until_ready(reference(P, X, Wc, Wd, b))

    # Exercise both code paths of the same kernel: the small-F folded
    # (block-diagonal) path and the general per-hop accumulation path.
    out_fold = jax.block_until_ready(node_class_dcnn(P, X, Wc, Wd, b, fold_hops=True))
    out_loop = jax.block_until_ready(node_class_dcnn(P, X, Wc, Wd, b, fold_hops=False))

    assert out_fold.shape == (N, C) and out_loop.shape == (N, C)
    # bf16 matmul operands (diffusion + dense) -> loosened tolerance vs. the
    # pure-f32 reference (outputs are tanh-bounded; observed error is O(1e-3)).
    assert jnp.allclose(out_fold, ref, atol=2e-2, rtol=2e-2), "fold path mismatch"
    assert jnp.allclose(out_loop, ref, atol=2e-2, rtol=2e-2), "loop path mismatch"

    print("KERNEL_OK")
</pallas_src>

<mosaic_0001>
module attributes {stable_mosaic.version = 11 : i64} {
  func.func @dcnn_kernel(%arg0: i32, %arg1: memref<8x64xf32, #tpu.memory_space<vmem>>, %arg2: memref<1x64x128xbf16, #tpu.memory_space<vmem>>, %arg3: memref<128x128xbf16, #tpu.memory_space<vmem>>, %arg4: memref<1x128xf32, #tpu.memory_space<vmem>>, %arg5: memref<8x128xf32, #tpu.memory_space<vmem>>) attributes {dimension_semantics = [#tpu.dimension_semantics<parallel>], iteration_bounds = array<i64: 2>, scalar_prefetch = 0 : i64, scratch_operands = 0 : i64, tpu.core_type = #tpu.core_type<tc>, window_params = [{transform_indices = @transform_0, window_bounds = array<i64: 8, 64>}, {pipeline_mode = #tpu.pipeline_mode<synchronous>, transform_indices = @transform_1, window_bounds = array<i64: 1, 64, 128>}, {pipeline_mode = #tpu.pipeline_mode<synchronous>, transform_indices = @transform_2, window_bounds = array<i64: 128, 128>}, {pipeline_mode = #tpu.pipeline_mode<synchronous>, transform_indices = @transform_3, window_bounds = array<i64: 1, 128>}, {transform_indices = @transform_4, window_bounds = array<i64: 8, 128>}]} {
    %cst = arith.constant 0.000000e+00 : f32
    %0 = vector.broadcast %cst : f32 to vector<8x128xf32>
    %c0 = arith.constant 0 : index
    %c0_0 = arith.constant 0 : index
    %1 = vector.load %arg1[%c0, %c0_0] : memref<8x64xf32, #tpu.memory_space<vmem>>, vector<8x64xf32>
    %2 = arith.truncf %1 : vector<8x64xf32> to vector<8x64xbf16>
    %c0_1 = arith.constant 0 : index
    %c0_2 = arith.constant 0 : index
    %c0_3 = arith.constant 0 : index
    %3 = vector.load %arg2[%c0_1, %c0_2, %c0_3] : memref<1x64x128xbf16, #tpu.memory_space<vmem>>, vector<1x64x128xbf16>
    %4 = vector.shape_cast %3 : vector<1x64x128xbf16> to vector<64x128xbf16>
    %cst_4 = arith.constant dense<0.000000e+00> : vector<8x128xf32>
    %5 = tpu.matmul %2, %4, %cst_4 {dimension_numbers = #tpu.dot_dimension_numbers<[1], [0], [0], [1], [0, 0, 1, 1], [], []>} : vector<8x64xbf16>, vector<64x128xbf16>, vector<8x128xf32> -> vector<8x128xf32>
    %6 = math.tanh %5 : vector<8x128xf32>
    %7 = arith.truncf %6 : vector<8x128xf32> to vector<8x128xbf16>
    %c0_5 = arith.constant 0 : index
    %c0_6 = arith.constant 0 : index
    %8 = vector.load %arg3[%c0_5, %c0_6] : memref<128x128xbf16, #tpu.memory_space<vmem>>, vector<128x128xbf16>
    %cst_7 = arith.constant dense<0.000000e+00> : vector<8x128xf32>
    %9 = tpu.matmul %7, %8, %cst_7 {dimension_numbers = #tpu.dot_dimension_numbers<[1], [0], [0], [1], [0, 0, 1, 1], [], []>} : vector<8x128xbf16>, vector<128x128xbf16>, vector<8x128xf32> -> vector<8x128xf32>
    %10 = arith.addf %0, %9 : vector<8x128xf32>
    %c0_8 = arith.constant 0 : index
    %c0_9 = arith.constant 0 : index
    %11 = vector.load %arg4[%c0_8, %c0_9] : memref<1x128xf32, #tpu.memory_space<vmem>>, vector<1x128xf32>
    %12 = vector.broadcast %11 : vector<1x128xf32> to vector<8x128xf32>
    %13 = arith.addf %10, %12 : vector<8x128xf32>
    %14 = math.tanh %13 : vector<8x128xf32>
    %c0_10 = arith.constant 0 : index
    %c0_11 = arith.constant 0 : index
    %15 = vector.load %arg5[%c0_10, %c0_11] : memref<8x128xf32, #tpu.memory_space<vmem>>, vector<8x128xf32>
    tpu.vector_store %arg5[%c0_10, %c0_11], %14 {strides = array<i32>} : memref<8x128xf32, #tpu.memory_space<vmem>>, vector<8x128xf32>,
    return
  }
  func.func @transform_0(%arg0: i32) -> (i32, i32) {
    %c0_i32 = arith.constant 0 : i32
    %c0_i32_0 = arith.constant 0 : i32
    return %arg0, %c0_i32 : i32, i32
  }
  func.func @transform_1(%arg0: i32) -> (i32, i32, i32) {
    %c0_i32 = arith.constant 0 : i32
    %c0_i32_0 = arith.constant 0 : i32
    %c0_i32_1 = arith.constant 0 : i32
    %c0_i32_2 = arith.constant 0 : i32
    return %c0_i32, %c0_i32_0, %c0_i32_1 : i32, i32, i32
  }
  func.func @transform_2(%arg0: i32) -> (i32, i32) {
    %c0_i32 = arith.constant 0 : i32
    %c0_i32_0 = arith.constant 0 : i32
    %c0_i32_1 = arith.constant 0 : i32
    return %c0_i32, %c0_i32_0 : i32, i32
  }
  func.func @transform_3(%arg0: i32) -> (i32, i32) {
    %c0_i32 = arith.constant 0 : i32
    %c0_i32_0 = arith.constant 0 : i32
    %c0_i32_1 = arith.constant 0 : i32
    return %c0_i32, %c0_i32_0 : i32, i32
  }
  func.func @transform_4(%arg0: i32) -> (i32, i32) {
    %c0_i32 = arith.constant 0 : i32
    %c0_i32_0 = arith.constant 0 : i32
    return %arg0, %c0_i32 : i32, i32
  }
}

</mosaic_0001>

<llo_original>
// kernel: tpu_custom_call.1
$region0: #{tpu_custom_call.1}
  #allocation0 [shape = 'u32[]', space=smem, size = 0x4, offset = 0x4, fixed_abs, tag = 'smem constant byte address 0x4 - core index']
  #allocation1 [shape = 'u32[144,128]{1,0:T(1,128)}', space=vmem, size = 0x12000, scoped, tag = 'internal scratch']
  %s0 = inlined_call_operand.hbm [shape: f32[16,64], index: 0, kind: input, shape index: {}]
  %s1 = inlined_call_operand.hbm [shape: bf16[1,64,128], index: 1, kind: input, shape index: {}]
  %s2 = inlined_call_operand.hbm [shape: bf16[128,128], index: 2, kind: input, shape index: {}]
  %s3 = inlined_call_operand.vmem [shape: f32[1,128], index: 3, kind: input, shape index: {}]
  %s4 = inlined_call_operand.hbm [shape: f32[16,128], index: 4, kind: output, shape index: {}]
  %s5 = sld [smem:[#allocation0]]
  $region61: #{tpu_custom_call.1} parent=0
    _
  %s7 = ssub.s32 1, %s5
  %s8 = scalar_select 0, %s7, %s5
  $region1: #{tpu_custom_call.1} parent=0
    #allocation2 [shape = 'u8[8192]{0}', space=vmem, size = 0x2000, scoped, tag = 'input window, operand 0']
    #allocation3 [shape = 's32[2]{0}', space=sflag, size = 0x8, scoped, tag = 'scoped memory for tpu_custom_call.1']
    #allocation4 [shape = 's32[2]{0}', space=sflag, size = 0x8, scoped, tag = 'scoped memory for tpu_custom_call.1']
    #allocation5 [shape = 'u8[16384]{0}', space=vmem, size = 0x4000, scoped, tag = 'input window, operand 1, single buffered']
    #allocation6 [shape = 's32[1]{0}', space=sflag, size = 0x4, scoped, tag = 'scoped memory for tpu_custom_call.1']
    #allocation7 [shape = 'u8[32768]{0}', space=vmem, size = 0x8000, scoped, tag = 'input window, operand 2, single buffered']
    #allocation8 [shape = 'u8[8192]{0}', space=vmem, size = 0x2000, scoped, tag = 'output window, operand 0']
    %9 = vsyncpa [#allocation3], 0
    %s10 = scalar_lea.sflag [#allocation3], 1
    %11 = vsyncpa %s10, 0
    %12 = vsyncpa [#allocation6], 0
    %13 = vsyncpa [#allocation4], 0
    %s14 = scalar_lea.sflag [#allocation4], 1
    %15 = vsyncpa %s14, 0
    loop: start=0, step=1, limit=4
    $region2: #{tpu_custom_call.1} parent=1 // loop_pre_header
      _
    $region3: #{tpu_custom_call.1} parent=1 // loop_header
      %s17 = sphi 0, %s21
      %p18 = scmp.ge.s32.totalorder %s17, 4
      %s27 = sphi 0, %s29
      %s30 = sphi 0, %s27
      %s31 = sphi 0, %s30
      %s47 = sphi 0, %s31
      %s51 = sphi 0, %s51
      %s53 = sphi 0, %s51
      %s54 = sphi 0, %s53
      %s68 = sphi 0, %s54
      %s72 = sphi 0, %s72
      %s74 = sphi 0, %s72
      %s75 = sphi 0, %s74
      %s89 = sphi 0, %s75
      %s93 = sphi 0, %s93
      %s95 = sphi 0, %s93
      %s96 = sphi 0, %s95
      %s110 = sphi 0, %s96
      %s116 = sphi 0, %s118
      %s119 = sphi 0, %s116
      %s120 = sphi 0, %s119
      %s136 = sphi 0, %s120
    $region4: #{tpu_custom_call.1} parent=1 // loop_header_branch
      %20 = sbr.rel (%p18) target = $region8
    $region5: #{tpu_custom_call.1} parent=1 // loop_body
      %s22 = ssub.s32 %s17, 1
      %s23 = ssub.s32 %s17, 2
      %s24 = sadd.s32 %s17, 1
      %s25 = ssub.s32 %s17, %s24
      %p26 = scmp.eq.s32.totalorder %s25, 0
      %s28 = sadd.s32 %s27, 1
      %s29 = scalar_select %p26, %s27, %s28
      %p32 = pneg %p26
      %p33 = scmp.eq.s32.totalorder %s17, 1
      %p34 = por %p32, %p33
      %p35 = scmp.ne.s32.totalorder %s27, %s30
      %p36 = scmp.eq.s32.totalorder %s17, 0
      %p37 = por %p35, %p36
      %p38 = scmp.ne.s32.totalorder %s27, %s30
      %p39 = scmp.eq.s32.totalorder %s22, 1
      %p40 = por %p38, %p39
      %p41 = scmp.ne.s32.totalorder %s30, %s31
      %p42 = scmp.eq.s32.totalorder %s22, 0
      %p43 = por %p41, %p42
      %p44 = scmp.ne.s32.totalorder %s30, %s31
      %p45 = scmp.eq.s32.totalorder %s23, 1
      %p46 = por %p44, %p45
      %p48 = scmp.ne.s32.totalorder %s31, %s47
      %p49 = scmp.eq.s32.totalorder %s23, 0
      %p50 = por %p48, %p49
      %s52 = sadd.s32 %s51, 1
      %p55 = scmp.eq.s32.totalorder %s17, 1
      %p56 = scmp.ne.s32.totalorder %s51, %s53
      %p57 = scmp.eq.s32.totalorder %s17, 0
      %p58 = por %p56, %p57
      %p59 = scmp.ne.s32.totalorder %s51, %s53
      %p60 = scmp.eq.s32.totalorder %s22, 1
      %p61 = por %p59, %p60
      %p62 = scmp.ne.s32.totalorder %s53, %s54
      %p63 = scmp.eq.s32.totalorder %s22, 0
      %p64 = por %p62, %p63
      %p65 = scmp.ne.s32.totalorder %s53, %s54
      %p66 = scmp.eq.s32.totalorder %s23, 1
      %p67 = por %p65, %p66
      %p69 = scmp.ne.s32.totalorder %s54, %s68
      %p70 = scmp.eq.s32.totalorder %s23, 0
      %p71 = por %p69, %p70
      %s73 = sadd.s32 %s72, 1
      %p76 = scmp.eq.s32.totalorder %s17, 1
      %p77 = scmp.ne.s32.totalorder %s72, %s74
      %p78 = scmp.eq.s32.totalorder %s17, 0
      %p79 = por %p77, %p78
      %p80 = scmp.ne.s32.totalorder %s72, %s74
      %p81 = scmp.eq.s32.totalorder %s22, 1
      %p82 = por %p80, %p81
      %p83 = scmp.ne.s32.totalorder %s74, %s75
      %p84 = scmp.eq.s32.totalorder %s22, 0
      %p85 = por %p83, %p84
      %p86 = scmp.ne.s32.totalorder %s74, %s75
      %p87 = scmp.eq.s32.totalorder %s23, 1
      %p88 = por %p86, %p87
      %p90 = scmp.ne.s32.totalorder %s75, %s89
      %p91 = scmp.eq.s32.totalorder %s23, 0
      %p92 = por %p90, %p91
      %s94 = sadd.s32 %s93, 1
      %p97 = scmp.eq.s32.totalorder %s17, 1
      %p98 = scmp.ne.s32.totalorder %s93, %s95
      %p99 = scmp.eq.s32.totalorder %s17, 0
      %p100 = por %p98, %p99
      %p101 = scmp.ne.s32.totalorder %s93, %s95
      %p102 = scmp.eq.s32.totalorder %s22, 1
      %p103 = por %p101, %p102
      %p104 = scmp.ne.s32.totalorder %s95, %s96
      %p105 = scmp.eq.s32.totalorder %s22, 0
      %p106 = por %p104, %p105
      %p107 = scmp.ne.s32.totalorder %s95, %s96
      %p108 = scmp.eq.s32.totalorder %s23, 1
      %p109 = por %p107, %p108
      %p111 = scmp.ne.s32.totalorder %s96, %s110
      %p112 = scmp.eq.s32.totalorder %s23, 0
      %p113 = por %p111, %p112
      %s114 = ssub.s32 %s17, %s24
      %p115 = scmp.eq.s32.totalorder %s114, 0
      %s117 = sadd.s32 %s116, 1
      %s118 = scalar_select %p115, %s116, %s117
      %p121 = pneg %p115
      %p122 = scmp.eq.s32.totalorder %s17, 1
      %p123 = por %p121, %p122
      %p124 = scmp.ne.s32.totalorder %s116, %s119
      %p125 = scmp.eq.s32.totalorder %s17, 0
      %p126 = por %p124, %p125
      %p127 = scmp.ne.s32.totalorder %s116, %s119
      %p128 = scmp.eq.s32.totalorder %s22, 1
      %p129 = por %p127, %p128
      %p130 = scmp.ne.s32.totalorder %s119, %s120
      %p131 = scmp.eq.s32.totalorder %s22, 0
      %p132 = por %p130, %p131
      %p133 = scmp.ne.s32.totalorder %s119, %s120
      %p134 = scmp.eq.s32.totalorder %s23, 1
      %p135 = por %p133, %p134
      %p137 = scmp.ne.s32.totalorder %s120, %s136
      %p138 = scmp.eq.s32.totalorder %s23, 0
      %p139 = por %p137, %p138
      %p140 = scmp.le.s32.totalorder 1, %s17
      %p141 = scmp.lt.s32.totalorder %s17, 3
      %p142 = pnand %p140, %p141
      %p143 = pneg %p142
      // Predicated region
      $region9: #{tpu_custom_call.1} parent=5 // pred_check
        _
      $region10: #{tpu_custom_call.1} parent=5 // pred_check_branch
        %145 = sbr.rel (%p142) target = $region12
      $region11: #{tpu_custom_call.1} parent=5 // pred_region
        %s146 = ssub.s32 %s17, 1
        // Predicated region
        $region13: #{tpu_custom_call.1} parent=11 // pred_check
          %p147 = pneg %p64
        $region14: #{tpu_custom_call.1} parent=11 // pred_check_branch
          %149 = sbr.rel (%p147) target = $region16
        $region15: #{tpu_custom_call.1} parent=11 // pred_region
          %s151 = ssub.s32 512, 512
          %152 = vsyncadd [#allocation6], %s151
          %s153 = sshll.u32 [#allocation5], 4
          %s154 = int_to_ptr.vmem [resolvable:$true] %s153
          %159 = dma.hbm_to_vmem [thread:$0]  %s1, 512, %s154, [#allocation6], 64, 64, 4
        $region16: #{tpu_custom_call.1} parent=11 // pred_fallthru
          _
        // Predicated region
        $region17: #{tpu_custom_call.1} parent=11 // pred_check
          %p160 = pneg %p85
        $region18: #{tpu_custom_call.1} parent=11 // pred_check_branch
          %162 = sbr.rel (%p160) target = $region20
        $region19: #{tpu_custom_call.1} parent=11 // pred_region
          %s164 = ssub.s32 1024, 1024
          %165 = vsyncadd [#allocation6], %s164
          %s166 = sshll.u32 [#allocation7], 4
          %s167 = int_to_ptr.vmem [resolvable:$true] %s166
          %172 = dma.hbm_to_vmem [thread:$0]  %s2, 1024, %s167, [#allocation6], 64, 64, 4
        $region20: #{tpu_custom_call.1} parent=11 // pred_fallthru
          _
        // Predicated region
        $region21: #{tpu_custom_call.1} parent=11 // pred_check
          %p173 = pneg %p106
        $region22: #{tpu_custom_call.1} parent=11 // pred_check_branch
          %175 = sbr.rel (%p173) target = $region24
        $region23: #{tpu_custom_call.1} parent=11 // pred_region
          _
        $region24: #{tpu_custom_call.1} parent=11 // pred_fallthru
          _
      $region12: #{tpu_custom_call.1} parent=5 // pred_fallthru
        _
      %p176 = scmp.lt.s32.totalorder %s17, 2
      // Predicated region
      $region25: #{tpu_custom_call.1} parent=5 // pred_check
        %p177 = pneg %p176
      $region26: #{tpu_custom_call.1} parent=5 // pred_check_branch
        %179 = sbr.rel (%p177) target = $region28
      $region27: #{tpu_custom_call.1} parent=5 // pred_region
        // Predicated region
        $region29: #{tpu_custom_call.1} parent=27 // pred_check
          %p180 = pneg %p37
        $region30: #{tpu_custom_call.1} parent=27 // pred_check_branch
          %182 = sbr.rel (%p180) target = $region32
        $region31: #{tpu_custom_call.1} parent=27 // pred_region
          %s183 = sand.u32 %s27, 1
          %s184 = scalar_lea.sflag [#allocation3], %s183
          %s185 = sand.u32 %s27, 1
          %s186 = smul.addr %s185, 8
          %s187 = scalar_lea.vmem [#allocation2], %s186
          %s189 = ssub.s32 128, 128
          %190 = vsyncadd %s184, %s189
          %s191 = smul.addr %s17, 128
          %s192 = scalar_lea.hbm %s0, %s191
          %s194 = sshll.u32 %s187, 4
          %s195 = int_to_ptr.vmem [resolvable:$true] %s194
          %197 = dma.hbm_to_vmem [thread:$0]  %s192, 128, %s195, %s184
        $region32: #{tpu_custom_call.1} parent=27 // pred_fallthru
          _
      $region28: #{tpu_custom_call.1} parent=5 // pred_fallthru
        _
      %p198 = scmp.le.s32.totalorder 1, %s17
      %p199 = scmp.lt.s32.totalorder %s17, 3
      %p200 = pnand %p198, %p199
      %p201 = pneg %p200
      // Predicated region
      $region33: #{tpu_custom_call.1} parent=5 // pred_check
        _
      $region34: #{tpu_custom_call.1} parent=5 // pred_check_branch
        %203 = sbr.rel (%p200) target = $region36
      $region35: #{tpu_custom_call.1} parent=5 // pred_region
        %s204 = ssub.s32 %s17, 1
        %s205 = sand.u32 %s30, 1
        %s206 = scalar_lea.sflag [#allocation3], %s205
        %s207 = sand.u32 %s30, 1
        %s208 = smul.addr %s207, 8
        %s209 = scalar_lea.vmem [#allocation2], %s208
        // Predicated region
        $region37: #{tpu_custom_call.1} parent=35 // pred_check
          %p210 = pneg %p43
        $region38: #{tpu_custom_call.1} parent=35 // pred_check_branch
          %212 = sbr.rel (%p210) target = $region40
        $region39: #{tpu_custom_call.1} parent=35 // pred_region
          %213 = dma.done %s206, 128
        $region40: #{tpu_custom_call.1} parent=35 // pred_fallthru
          _
        // Predicated region
        $region41: #{tpu_custom_call.1} parent=35 // pred_check
          %p214 = pneg %p64
        $region42: #{tpu_custom_call.1} parent=35 // pred_check_branch
          %216 = sbr.rel (%p214) target = $region44
        $region43: #{tpu_custom_call.1} parent=35 // pred_region
          %217 = dma.done [#allocation6], 512
        $region44: #{tpu_custom_call.1} parent=35 // pred_fallthru
          _
        // Predicated region
        $region45: #{tpu_custom_call.1} parent=35 // pred_check
          %p218 = pneg %p85
        $region46: #{tpu_custom_call.1} parent=35 // pred_check_branch
          %220 = sbr.rel (%p218) target = $region48
        $region47: #{tpu_custom_call.1} parent=35 // pred_region
          %221 = dma.done [#allocation6], 1024
        $region48: #{tpu_custom_call.1} parent=35 // pred_fallthru
          _
        %s222 = sand.u32 %s30, 1
        %s223 = scalar_lea.sflag [#allocation3], %s222
        %s224 = sand.u32 %s30, 1
        %s225 = smul.addr %s224, 8
        %s226 = scalar_lea.vmem [#allocation2], %s225
        %p227 = pneg %p43
        %p228 = pneg %p40
        %p229 = pneg %p64
        %p230 = pneg %p61
        %p231 = pneg %p85
        %p232 = pneg %p82
        %p233 = pneg %p106
        %p234 = pneg %p103
        %p235 = pneg %p132
        %p236 = pneg %p129
        %s237 = sand.u32 %s119, 1
        %s238 = scalar_lea.sflag [#allocation4], %s237
        %s239 = sand.u32 %s119, 1
        %s240 = smul.addr %s239, 8
        %s241 = scalar_lea.vmem [#allocation8], %s240
        %v243 = vld [vmem:[%s209] sm:$0xff]
        %v244 = vpack.c.bf16 %v243, %v243
        %v245 = vld [vmem:[#allocation5] sm:$0xf]
        %v246 = vld [vmem:[#allocation5 + $0x4] sm:$0xf]
        %v247 = vld [vmem:[#allocation5 + $0x8] sm:$0xf]
        %v248 = vld [vmem:[#allocation5 + $0xc] sm:$0xf]
        %v249 = vld [vmem:[#allocation5 + $0x10] sm:$0xf]
        %v250 = vld [vmem:[#allocation5 + $0x14] sm:$0xf]
        %v251 = vld [vmem:[#allocation5 + $0x18] sm:$0xf]
        %v252 = vld [vmem:[#allocation5 + $0x1c] sm:$0xf]
        %v261 = vunpack.c.l.b16 %v245
        %v262 = vunpack.c.l.b16 %v246
        %v263 = vunpack.c.l.b16 %v247
        %v264 = vunpack.c.l.b16 %v248
        %v265 = vunpack.c.l.b16 %v249
        %v266 = vunpack.c.l.b16 %v250
        %v267 = vunpack.c.l.b16 %v251
        %v268 = vunpack.c.l.b16 %v252
        %v269 = vpack.c.b16 %v262, %v261
        %v270 = vpack.c.b16 %v264, %v263
        %v271 = vpack.c.b16 %v266, %v265
        %v272 = vpack.c.b16 %v268, %v267
        %vm277 = vcmask 523264
        %v279 = vsel %vm277, %v244, 0
        %281 = vmatprep.subr.bf16.mxu0 0
        %282 = vmatpush1.bf16.msra.mxu0 %v269
        %283 = vmatprep.subr.bf16.mxu0 0
        %284 = vmatpush1.bf16.msra.mxu0 %v270
        %285 = vmatprep.subr.bf16.mxu0 0
        %286 = vmatpush1.bf16.msra.mxu0 %v271
        %287 = vmatprep.subr.bf16.mxu0 0
        %288 = vmatpush1.bf16.msra.mxu0 %v272
        %289 = vmatprep.subr.bf16.mxu0 0
        %290 = vmatpush1.bf16.msra.mxu0 0
        %291 = vmatprep.subr.bf16.mxu0 0
        %292 = vmatpush1.bf16.msra.mxu0 0
        %293 = vmatprep.subr.bf16.mxu0 0
        %294 = vmatpush1.bf16.msra.mxu0 0
        %295 = vmatprep.subr.bf16.mxu0 0
        %296 = vmatpush1.bf16.msra.mxu0 0
        %297 = vmatprep.subr.bf16.mxu0 0
        %298 = vmatpush1.bf16.msra.mxu0 0
        %299 = vmatprep.subr.bf16.mxu0 0
        %300 = vmatpush1.bf16.msra.mxu0 0
        %301 = vmatprep.subr.bf16.mxu0 0
        %302 = vmatpush1.bf16.msra.mxu0 0
        %303 = vmatprep.subr.bf16.mxu0 0
        %304 = vmatpush1.bf16.msra.mxu0 0
        %305 = vmatprep.subr.bf16.mxu0 0
        %306 = vmatpush1.bf16.msra.mxu0 0
        %307 = vmatprep.subr.bf16.mxu0 0
        %308 = vmatpush1.bf16.msra.mxu0 0
        %309 = vmatprep.subr.bf16.mxu0 0
        %310 = vmatpush1.bf16.msra.mxu0 0
        %311 = vmatprep.subr.bf16.mxu0 0
        %312 = vmatpush1.bf16.msra.mxu0 0
        %313 = vmatprep.mubr.bf16.mxu0 0
        %314 = vmatmul.mubr.bf16.gmra.mrb[0].mxu0 %v279
        %v315 = vpop.f32.mrb[0].mxu0
        %v316 = vadd.f32 0.0, %v315
        %v317 = vpop.f32.mrb[0].mxu0
        %v318 = vpop.f32.mrb[0].mxu0
        %v319 = vpop.f32.mrb[0].mxu0
        %320 = vdwg.mxu0
        %v321 = vtanh.pop %v316
        %v322 = vpack.c.bf16 %v321, %v321
        %v323 = vld [vmem:[#allocation7] sm:$0xf]
        %v324 = vld [vmem:[#allocation7 + $0x4] sm:$0xf]
        %v325 = vld [vmem:[#allocation7 + $0x8] sm:$0xf]
        %v326 = vld [vmem:[#allocation7 + $0xc] sm:$0xf]
        %v327 = vld [vmem:[#allocation7 + $0x10] sm:$0xf]
        %v328 = vld [vmem:[#allocation7 + $0x14] sm:$0xf]
        %v329 = vld [vmem:[#allocation7 + $0x18] sm:$0xf]
        %v330 = vld [vmem:[#allocation7 + $0x1c] sm:$0xf]
        %v331 = vld [vmem:[#allocation7 + $0x20] sm:$0xf]
        %v332 = vld [vmem:[#allocation7 + $0x24] sm:$0xf]
        %v333 = vld [vmem:[#allocation7 + $0x28] sm:$0xf]
        %v334 = vld [vmem:[#allocation7 + $0x2c] sm:$0xf]
        %v335 = vld [vmem:[#allocation7 + $0x30] sm:$0xf]
        %v336 = vld [vmem:[#allocation7 + $0x34] sm:$0xf]
        %v337 = vld [vmem:[#allocation7 + $0x38] sm:$0xf]
        %v338 = vld [vmem:[#allocation7 + $0x3c] sm:$0xf]
        %v339 = vld [vmem:[%s3] sm:$0x1]
        %v341 = vlaneseq
        %v342 = vshrl.u32 %v341, 7
        %v343 = vsub.s32 0, %v342
        %v344 = vrot.slane %v339, %v343
        %v362 = vunpack.c.l.b16 %v323
        %v363 = vunpack.c.l.b16 %v324
        %v364 = vunpack.c.l.b16 %v325
        %v365 = vunpack.c.l.b16 %v326
        %v366 = vunpack.c.l.b16 %v327
        %v367 = vunpack.c.l.b16 %v328
        %v368 = vunpack.c.l.b16 %v329
        %v369 = vunpack.c.l.b16 %v330
        %v370 = vunpack.c.l.b16 %v331
        %v371 = vunpack.c.l.b16 %v332
        %v372 = vunpack.c.l.b16 %v333
        %v373 = vunpack.c.l.b16 %v334
        %v374 = vunpack.c.l.b16 %v335
        %v375 = vunpack.c.l.b16 %v336
        %v376 = vunpack.c.l.b16 %v337
        %v377 = vunpack.c.l.b16 %v338
        %v378 = vpack.c.b16 %v363, %v362
        %v379 = vpack.c.b16 %v365, %v364
        %v380 = vpack.c.b16 %v367, %v366
        %v381 = vpack.c.b16 %v369, %v368
        %v382 = vpack.c.b16 %v371, %v370
        %v383 = vpack.c.b16 %v373, %v372
        %v384 = vpack.c.b16 %v375, %v374
        %v385 = vpack.c.b16 %v377, %v376
        %394 = vmatprep.subr.bf16.mxu0 0
        %395 = vmatpush1.bf16.msra.mxu0 %v378
        %396 = vmatprep.subr.bf16.mxu0 0
        %397 = vmatpush1.bf16.msra.mxu0 %v379
        %398 = vmatprep.subr.bf16.mxu0 0
        %399 = vmatpush1.bf16.msra.mxu0 %v380
        %400 = vmatprep.subr.bf16.mxu0 0
        %401 = vmatpush1.bf16.msra.mxu0 %v381
        %402 = vmatprep.subr.bf16.mxu0 0
        %403 = vmatpush1.bf16.msra.mxu0 %v382
        %404 = vmatprep.subr.bf16.mxu0 0
        %405 = vmatpush1.bf16.msra.mxu0 %v383
        %406 = vmatprep.subr.bf16.mxu0 0
        %407 = vmatpush1.bf16.msra.mxu0 %v384
        %408 = vmatprep.subr.bf16.mxu0 0
        %409 = vmatpush1.bf16.msra.mxu0 %v385
        %410 = vmatprep.subr.bf16.mxu0 0
        %411 = vmatpush1.bf16.msra.mxu0 0
        %412 = vmatprep.subr.bf16.mxu0 0
        %413 = vmatpush1.bf16.msra.mxu0 0
        %414 = vmatprep.subr.bf16.mxu0 0
        %415 = vmatpush1.bf16.msra.mxu0 0
        %416 = vmatprep.subr.bf16.mxu0 0
        %417 = vmatpush1.bf16.msra.mxu0 0
        %418 = vmatprep.subr.bf16.mxu0 0
        %419 = vmatpush1.bf16.msra.mxu0 0
        %420 = vmatprep.subr.bf16.mxu0 0
        %421 = vmatpush1.bf16.msra.mxu0 0
        %422 = vmatprep.subr.bf16.mxu0 0
        %423 = vmatpush1.bf16.msra.mxu0 0
        %424 = vmatprep.subr.bf16.mxu0 0
        %425 = vmatpush1.bf16.msra.mxu0 0
        %426 = vmatprep.mubr.bf16.mxu0 0
        %427 = vmatmul.mubr.bf16.gmra.mrb[0].mxu0 %v322
        %v428 = vpop.f32.mrb[0].mxu0
        %v429 = vadd.f32 %v344, %v428
        %v430 = vpop.f32.mrb[0].mxu0
        %v431 = vpop.f32.mrb[0].mxu0
        %v432 = vpop.f32.mrb[0].mxu0
        %433 = vdwg.mxu0
        %v434 = vtanh.pop %v429
        %435 = vst [vmem:[%s241] sm:$0xff] %v434
        %s436 = sand.u32 %s119, 1
        %s437 = scalar_lea.sflag [#allocation4], %s436
        %s438 = sand.u32 %s119, 1
        %s439 = smul.addr %s438, 8
        %s440 = scalar_lea.vmem [#allocation8], %s439
        // Predicated region
        $region49: #{tpu_custom_call.1} parent=35 // pred_check
          %p441 = pneg %p129
        $region50: #{tpu_custom_call.1} parent=35 // pred_check_branch
          %443 = sbr.rel (%p441) target = $region52
        $region51: #{tpu_custom_call.1} parent=35 // pred_region
          %s445 = ssub.s32 128, 128
          %446 = vsyncadd %s437, %s445
          %s447 = smul.addr %s22, 128
          %s448 = scalar_lea.hbm %s4, %s447
          %s450 = sshll.u32 %s440, 4
          %s451 = int_to_ptr.vmem [resolvable:$true] %s450
          %453 = dma.vmem_to_hbm [thread:$0]  %s451, 128, %s448, %s437
        $region52: #{tpu_custom_call.1} parent=35 // pred_fallthru
          _
      $region36: #{tpu_custom_call.1} parent=5 // pred_fallthru
        _
      %p454 = scmp.le.s32.totalorder 2, %s17
      // Predicated region
      $region53: #{tpu_custom_call.1} parent=5 // pred_check
        %p455 = pneg %p454
      $region54: #{tpu_custom_call.1} parent=5 // pred_check_branch
        %457 = sbr.rel (%p455) target = $region56
      $region55: #{tpu_custom_call.1} parent=5 // pred_region
        %s458 = ssub.s32 %s17, 2
        // Predicated region
        $region57: #{tpu_custom_call.1} parent=55 // pred_check
          %p459 = pneg %p135
        $region58: #{tpu_custom_call.1} parent=55 // pred_check_branch
          %461 = sbr.rel (%p459) target = $region60
        $region59: #{tpu_custom_call.1} parent=55 // pred_region
          %s462 = sand.u32 %s120, 1
          %s463 = scalar_lea.sflag [#allocation4], %s462
          %s464 = sand.u32 %s120, 1
          %s465 = smul.addr %s464, 8
          %s466 = scalar_lea.vmem [#allocation8], %s465
          %467 = dma.done %s463, 128
        $region60: #{tpu_custom_call.1} parent=55 // pred_fallthru
          _
      $region56: #{tpu_custom_call.1} parent=5 // pred_fallthru
        _
    $region6: #{tpu_custom_call.1} parent=1 // loop_footer
      %s21 = sadd.s32 1, %s17
    $region7: #{tpu_custom_call.1} parent=1 // loop_footer_branch
      %16 = sbr.rel target = $region3
    $region8: #{tpu_custom_call.1} parent=1 // loop_exit
      _
    %468 = vsyncpa [#allocation3], 1
    %s469 = scalar_lea.sflag [#allocation3], 1
    %470 = vsyncpa %s469, 1
    %471 = vsyncpa [#allocation6], 1
    %472 = vsyncpa [#allocation4], 1
    %s473 = scalar_lea.sflag [#allocation4], 1
    %474 = vsyncpa %s473, 1

</llo_original>
